<compile_context>
chip_gen: v5e
topology: v5e:2x2
jax: 0.10.0
libtpu: 0.0.40
codegen_flags: <defaults>
</compile_context>

<pallas_src>
import functools

import jax
import jax.numpy as jnp
from jax.experimental import pallas as pl
from jax.experimental.pallas import tpu as pltpu


def _pick_tile(n, pref):
    """Largest tile <= pref that evenly divides n (falls back to full n)."""
    if n <= pref:
        return n
    for t in (pref, 512, 256, 128, 64, 32, 16, 8):
        if t <= pref and n % t == 0:
            return t
    return n


def _compiler_params(sem):
    return pltpu.CompilerParams(
        dimension_semantics=sem,
        vmem_limit_bytes=64 * 1024 * 1024)


# ---------------------------------------------------------------------------
# Kernel 1a: packed Q/K/V projection (self-attention): y = x @ [Wk|Wv|Wq] + b
# ---------------------------------------------------------------------------
def _qkv_packed_kernel(x_ref, w_ref, b_ref, o_ref):
    o_ref[...] = (jnp.dot(x_ref[...], w_ref[...],
                          preferred_element_type=jnp.float32)
                  + b_ref[...]).astype(o_ref.dtype)


def qkv_projection_packed(x2d, w_qkv, b_qkv, *, row_tile=512):
    M, D = x2d.shape
    D3 = w_qkv.shape[1]
    tm = _pick_tile(M, row_tile)
    itemsize = x2d.dtype.itemsize
    cost = pl.CostEstimate(
        flops=2 * M * D * D3,
        transcendentals=0,
        bytes_accessed=int((M * D + D * D3 + D3 + M * D3) * itemsize))
    return pl.pallas_call(
        _qkv_packed_kernel,
        grid=(pl.cdiv(M, tm),),
        in_specs=[pl.BlockSpec((tm, D), lambda i: (i, 0)),
                  pl.BlockSpec((D, D3), lambda i: (0, 0)),   # resident weights
                  pl.BlockSpec((1, D3), lambda i: (0, 0))],
        out_specs=pl.BlockSpec((tm, D3), lambda i: (i, 0)),  # lane-dense slab
        out_shape=jax.ShapeDtypeStruct((M, D3), x2d.dtype),
        compiler_params=_compiler_params(("parallel",)),
        cost_estimate=cost,
    )(x2d, w_qkv, b_qkv)


# ---------------------------------------------------------------------------
# Kernel 1b: fused separate Q/K/V projections (cross-attention capable)
# ---------------------------------------------------------------------------
def _qkv_kernel(kx_ref, vx_ref, qx_ref,
                wk_ref, bk_ref, wv_ref, bv_ref, wq_ref, bq_ref,
                k_ref, v_ref, q_ref):
    k_ref[...] = (jnp.dot(kx_ref[...], wk_ref[...],
                          preferred_element_type=jnp.float32)
                  + bk_ref[...]).astype(k_ref.dtype)
    v_ref[...] = (jnp.dot(vx_ref[...], wv_ref[...],
                          preferred_element_type=jnp.float32)
                  + bv_ref[...]).astype(v_ref.dtype)
    q_ref[...] = (jnp.dot(qx_ref[...], wq_ref[...],
                          preferred_element_type=jnp.float32)
                  + bq_ref[...]).astype(q_ref.dtype)


def qkv_projection(kx2d, vx2d, qx2d, params, *, row_tile=512):
    M, D = qx2d.shape
    tm = _pick_tile(M, row_tile)
    row_spec = pl.BlockSpec((tm, D), lambda i: (i, 0))
    w_spec = pl.BlockSpec((D, D), lambda i: (0, 0))    # resident across grid steps
    b_spec = pl.BlockSpec((1, D), lambda i: (0, 0))
    out = jax.ShapeDtypeStruct((M, D), qx2d.dtype)
    itemsize = qx2d.dtype.itemsize
    cost = pl.CostEstimate(
        flops=3 * 2 * M * D * D,
        transcendentals=0,
        bytes_accessed=int((6 * M * D + 3 * D * D + 3 * D) * itemsize))
    return pl.pallas_call(
        _qkv_kernel,
        grid=(pl.cdiv(M, tm),),
        in_specs=[row_spec, row_spec, row_spec,
                  w_spec, b_spec, w_spec, b_spec, w_spec, b_spec],
        out_specs=(row_spec, row_spec, row_spec),
        out_shape=(out, out, out),
        compiler_params=_compiler_params(("parallel",)),
        cost_estimate=cost,
    )(kx2d, vx2d, qx2d,
      params["w_k"], params["b_k"].reshape(1, D),
      params["w_v"], params["b_v"].reshape(1, D),
      params["w_q"], params["b_q"].reshape(1, D))


# ---------------------------------------------------------------------------
# Kernel 2: scaled dot-product attention, q-row tiled, per (batch, head) step
# ---------------------------------------------------------------------------
def _attention_kernel(scale, q_ref, k_ref, v_ref, ctx_ref, *attn_refs):
    # Fold the softmax scale into q (tq*dph multiply instead of tq*L).
    q = q_ref[0, 0] * scale                       # (tq, dph)
    k = k_ref[0, 0]                               # (L, dph)
    v = v_ref[0, 0]                               # (L, dph)
    # contract last dims directly -> no explicit k.T (no XLU transpose / copy)
    s = jax.lax.dot_general(q, k, dimension_numbers=(((1,), (1,)), ((), ())),
                            preferred_element_type=jnp.float32)   # (tq, L)
    s = s - jnp.max(s, axis=-1, keepdims=True)
    e = jnp.exp(s)
    # EXACT normalization: the attention matrix is a user-visible output.
    p = e / jnp.sum(e, axis=-1, keepdims=True)
    if attn_refs:                                 # optional attn writeback
        attn_refs[0][0, 0] = p.astype(attn_refs[0].dtype)
    ctx_ref[0, 0] = jnp.dot(p.astype(v.dtype), v,
                            preferred_element_type=jnp.float32
                            ).astype(ctx_ref.dtype)


def scaled_dot_product_attention(q4, k4, v4, scale, *, q_tile=256,
                                 return_attention=True):
    # q4/k4/v4: (B, H, L, dph)
    B, H, L, dph = q4.shape
    tq = _pick_tile(L, q_tile)
    kern = functools.partial(_attention_kernel, scale)
    q_spec = pl.BlockSpec((1, 1, tq, dph), lambda b, h, i: (b, h, i, 0))
    kv_spec = pl.BlockSpec((1, 1, L, dph), lambda b, h, i: (b, h, 0, 0))
    ctx_spec = pl.BlockSpec((1, 1, tq, dph), lambda b, h, i: (b, h, i, 0))
    out_specs = [ctx_spec]
    out_shapes = [jax.ShapeDtypeStruct((B, H, L, dph), q4.dtype)]
    itemsize = q4.dtype.itemsize
    bytes_accessed = 4 * B * H * L * dph * itemsize
    if return_attention:
        out_specs.append(pl.BlockSpec((1, 1, tq, L), lambda b, h, i: (b, h, i, 0)))
        out_shapes.append(jax.ShapeDtypeStruct((B, H, L, L), q4.dtype))
        bytes_accessed += B * H * L * L * itemsize
    cost = pl.CostEstimate(
        flops=2 * 2 * B * H * L * L * dph,
        transcendentals=B * H * L * L,
        bytes_accessed=int(bytes_accessed))
    outs = pl.pallas_call(
        kern,
        grid=(B, H, pl.cdiv(L, tq)),
        in_specs=[q_spec, kv_spec, kv_spec],
        out_specs=tuple(out_specs),
        out_shape=tuple(out_shapes),
        compiler_params=_compiler_params(("parallel", "parallel", "parallel")),
        cost_estimate=cost,
    )(q4, k4, v4)
    if return_attention:
        return outs[0], outs[1]
    return outs[0], None


# ---------------------------------------------------------------------------
# Kernel 3: final linear + residual + LayerNorm (fused, row-tiled)
# ---------------------------------------------------------------------------
def _final_kernel(eps, ctx_ref, w_ref, b_ref, res_ref, g_ref, beta_ref, o_ref):
    y = jnp.dot(ctx_ref[...], w_ref[...],
                preferred_element_type=jnp.float32) + b_ref[...]
    z = res_ref[...].astype(jnp.float32) + y     # dropout p=0 -> identity
    mean = jnp.mean(z, axis=-1, keepdims=True)
    var = jnp.mean((z - mean) ** 2, axis=-1, keepdims=True)
    zn = (z - mean) * jax.lax.rsqrt(var + eps)
    o_ref[...] = (zn * g_ref[...] + beta_ref[...]).astype(o_ref.dtype)


def final_linear_residual_layernorm(ctx2d, w, b, res2d, gamma, beta,
                                    eps=1e-5, *, row_tile=512):
    M, D = ctx2d.shape
    tm = _pick_tile(M, row_tile)
    row_spec = pl.BlockSpec((tm, D), lambda i: (i, 0))
    w_spec = pl.BlockSpec((D, D), lambda i: (0, 0))
    vec_spec = pl.BlockSpec((1, D), lambda i: (0, 0))
    itemsize = ctx2d.dtype.itemsize
    cost = pl.CostEstimate(
        flops=2 * M * D * D + 8 * M * D,
        transcendentals=M,                         # rsqrt per row
        bytes_accessed=int((3 * M * D + D * D + 3 * D) * itemsize))
    return pl.pallas_call(
        functools.partial(_final_kernel, eps),
        grid=(pl.cdiv(M, tm),),
        in_specs=[row_spec, w_spec, vec_spec, row_spec, vec_spec, vec_spec],
        out_specs=row_spec,
        out_shape=jax.ShapeDtypeStruct((M, D), ctx2d.dtype),
        compiler_params=_compiler_params(("parallel",)),
        cost_estimate=cost,
    )(ctx2d, w, b.reshape(1, D), res2d, gamma.reshape(1, D), beta.reshape(1, D))


# ---------------------------------------------------------------------------
# Full module forward
# ---------------------------------------------------------------------------
def multi_head_attention(key_in, value_in, query_in, params, num_heads,
                         *, return_attention=True):
    B, L, model_dim = query_in.shape
    dph = model_dim // num_heads
    assert dph * num_heads == model_dim
    # Reference's quirky scale divides by zero when dim_per_head < num_heads.
    assert dph // num_heads > 0, "dim_per_head // num_heads must be >= 1"
    M = B * L

    self_attention = (key_in is value_in) and (value_in is query_in)
    if self_attention:
        # One lane-dense (D, 3D) matmul per row tile.
        w_qkv = jnp.concatenate(
            [params["w_k"], params["w_v"], params["w_q"]], axis=1)
        b_qkv = jnp.concatenate(
            [params["b_k"], params["b_v"], params["b_q"]]).reshape(1, 3 * model_dim)
        kvq = qkv_projection_packed(query_in.reshape(M, model_dim), w_qkv, b_qkv)
        k2d = kvq[:, :model_dim]
        v2d = kvq[:, model_dim:2 * model_dim]
        q2d = kvq[:, 2 * model_dim:]
    else:
        k2d, v2d, q2d = qkv_projection(
            key_in.reshape(M, model_dim),
            value_in.reshape(M, model_dim),
            query_in.reshape(M, model_dim),
            params)

    # Exact reproduction of PyTorch's contiguous `.view(B*nh, -1, dph)` head
    # split, grouped per batch element for the attention kernel (pure
    # row-major reshapes -> no data movement, identical semantics).
    k4 = k2d.reshape(B, num_heads, L, dph)
    v4 = v2d.reshape(B, num_heads, L, dph)
    q4 = q2d.reshape(B, num_heads, L, dph)

    # quirky scale from the reference: (key.size(-1) // num_heads) ** -0.5
    scale = float(dph // num_heads) ** (-0.5)

    ctx4, attn4 = scaled_dot_product_attention(
        q4, k4, v4, scale, return_attention=return_attention)
    attention = (attn4.reshape(B * num_heads, L, L)
                 if return_attention else None)

    # `.view(batch, -1, dph*num_heads)` on the (B*nh, L, dph) context is the
    # same contiguous reshape back to (B*L, model_dim).
    ctx2d = ctx4.reshape(M, model_dim)
    res2d = query_in.reshape(M, model_dim)

    out2d = final_linear_residual_layernorm(
        ctx2d, params["w_o"], params["b_o"], res2d,
        params["gamma"], params["beta"])
    return out2d.reshape(B, L, model_dim), attention


# ---------------------------------------------------------------------------
# Pure-JAX reference (for correctness check)
# ---------------------------------------------------------------------------
def reference(key_in, value_in, query_in, params, num_heads):
    B, L, model_dim = query_in.shape
    dph = model_dim // num_heads
    residual = query_in
    k = key_in @ params["w_k"] + params["b_k"]
    v = value_in @ params["w_v"] + params["b_v"]
    q = query_in @ params["w_q"] + params["b_q"]
    k = k.reshape(B * num_heads, -1, dph)
    v = v.reshape(B * num_heads, -1, dph)
    q = q.reshape(B * num_heads, -1, dph)
    scale = float(dph // num_heads) ** (-0.5)
    scores = jnp.einsum("bqd,bkd->bqk", q, k) * scale
    attn = jax.nn.softmax(scores, axis=-1)
    ctx = jnp.einsum("bqk,bkd->bqd", attn, v).reshape(B, -1, model_dim)
    out = ctx @ params["w_o"] + params["b_o"]
    z = residual + out
    mean = z.mean(-1, keepdims=True)
    var = ((z - mean) ** 2).mean(-1, keepdims=True)
    zn = (z - mean) / jnp.sqrt(var + 1e-5)
    return zn * params["gamma"] + params["beta"], attn


if __name__ == "__main__":
    B, L, MODEL_DIM, NUM_HEADS = 2, 8, 64, 4   # dim_per_head = 16

    root = jax.random.PRNGKey(0)
    keys = jax.random.split(root, 12)
    s = MODEL_DIM ** -0.5
    params = {
        "w_k": jax.random.uniform(keys[0], (MODEL_DIM, MODEL_DIM), jnp.float32, -s, s),
        "b_k": jax.random.uniform(keys[1], (MODEL_DIM,), jnp.float32, -s, s),
        "w_v": jax.random.uniform(keys[2], (MODEL_DIM, MODEL_DIM), jnp.float32, -s, s),
        "b_v": jax.random.uniform(keys[3], (MODEL_DIM,), jnp.float32, -s, s),
        "w_q": jax.random.uniform(keys[4], (MODEL_DIM, MODEL_DIM), jnp.float32, -s, s),
        "b_q": jax.random.uniform(keys[5], (MODEL_DIM,), jnp.float32, -s, s),
        "w_o": jax.random.uniform(keys[6], (MODEL_DIM, MODEL_DIM), jnp.float32, -s, s),
        "b_o": jax.random.uniform(keys[7], (MODEL_DIM,), jnp.float32, -s, s),
        "gamma": jnp.ones((MODEL_DIM,), jnp.float32),   # LayerNorm default init
        "beta": jnp.zeros((MODEL_DIM,), jnp.float32),
    }

    key_in = jax.random.normal(keys[8], (B, L, MODEL_DIM), jnp.float32)
    value_in = jax.random.normal(keys[9], (B, L, MODEL_DIM), jnp.float32)
    query_in = jax.random.normal(keys[10], (B, L, MODEL_DIM), jnp.float32)

    # Tolerance 2e-3 covers MXU default-precision matmul differences vs the
    # XLA reference; the softmax itself is now exact (rows sum to 1).

    # ---- cross-attention path (separate fused QKV kernel) -----------------
    out, attn = multi_head_attention(key_in, value_in, query_in, params, NUM_HEADS)
    out = jax.block_until_ready(out)
    attn = jax.block_until_ready(attn)
    ref_out, ref_attn = reference(key_in, value_in, query_in, params, NUM_HEADS)
    assert out.shape == (B, L, MODEL_DIM)
    assert attn.shape == (B * NUM_HEADS, L, L)
    assert jnp.allclose(out, ref_out, rtol=2e-3, atol=2e-3)
    assert jnp.allclose(attn, ref_attn, rtol=2e-3, atol=2e-3)
    # attention rows must sum to 1 (exact softmax normalization)
    assert jnp.allclose(attn.sum(-1), 1.0, rtol=1e-5, atol=1e-5)

    # ---- self-attention path (packed (D, 3D) QKV kernel) ------------------
    out_s, attn_s = multi_head_attention(query_in, query_in, query_in,
                                         params, NUM_HEADS)
    out_s = jax.block_until_ready(out_s)
    attn_s = jax.block_until_ready(attn_s)
    ref_out_s, ref_attn_s = reference(query_in, query_in, query_in,
                                      params, NUM_HEADS)
    assert jnp.allclose(out_s, ref_out_s, rtol=2e-3, atol=2e-3)
    assert jnp.allclose(attn_s, ref_attn_s, rtol=2e-3, atol=2e-3)

    print("KERNEL_OK")
</pallas_src>

<mosaic_0001>
module attributes {stable_mosaic.version = 11 : i64} {
  func.func @_qkv_kernel(%arg0: i32, %arg1: memref<16x64xf32, #tpu.memory_space<vmem>>, %arg2: memref<16x64xf32, #tpu.memory_space<vmem>>, %arg3: memref<16x64xf32, #tpu.memory_space<vmem>>, %arg4: memref<64x64xf32, #tpu.memory_space<vmem>>, %arg5: memref<1x64xf32, #tpu.memory_space<vmem>>, %arg6: memref<64x64xf32, #tpu.memory_space<vmem>>, %arg7: memref<1x64xf32, #tpu.memory_space<vmem>>, %arg8: memref<64x64xf32, #tpu.memory_space<vmem>>, %arg9: memref<1x64xf32, #tpu.memory_space<vmem>>, %arg10: memref<16x64xf32, #tpu.memory_space<vmem>>, %arg11: memref<16x64xf32, #tpu.memory_space<vmem>>, %arg12: memref<16x64xf32, #tpu.memory_space<vmem>>) attributes {dimension_semantics = [#tpu.dimension_semantics<parallel>], iteration_bounds = array<i64: 1>, scalar_prefetch = 0 : i64, scratch_operands = 0 : i64, tpu.core_type = #tpu.core_type<tc>, window_params = [{transform_indices = @transform_0, window_bounds = array<i64: 16, 64>}, {transform_indices = @transform_1, window_bounds = array<i64: 16, 64>}, {transform_indices = @transform_2, window_bounds = array<i64: 16, 64>}, {pipeline_mode = #tpu.pipeline_mode<synchronous>, transform_indices = @transform_3, window_bounds = array<i64: 64, 64>}, {pipeline_mode = #tpu.pipeline_mode<synchronous>, transform_indices = @transform_4, window_bounds = array<i64: 1, 64>}, {pipeline_mode = #tpu.pipeline_mode<synchronous>, transform_indices = @transform_5, window_bounds = array<i64: 64, 64>}, {pipeline_mode = #tpu.pipeline_mode<synchronous>, transform_indices = @transform_6, window_bounds = array<i64: 1, 64>}, {pipeline_mode = #tpu.pipeline_mode<synchronous>, transform_indices = @transform_7, window_bounds = array<i64: 64, 64>}, {pipeline_mode = #tpu.pipeline_mode<synchronous>, transform_indices = @transform_8, window_bounds = array<i64: 1, 64>}, {transform_indices = @transform_9, window_bounds = array<i64: 16, 64>}, {transform_indices = @transform_10, window_bounds = array<i64: 16, 64>}, {transform_indices = @transform_11, window_bounds = array<i64: 16, 64>}]} {
    %c0 = arith.constant 0 : index
    %c0_0 = arith.constant 0 : index
    %0 = vector.load %arg1[%c0, %c0_0] : memref<16x64xf32, #tpu.memory_space<vmem>>, vector<16x64xf32>
    %c0_1 = arith.constant 0 : index
    %c0_2 = arith.constant 0 : index
    %1 = vector.load %arg4[%c0_1, %c0_2] : memref<64x64xf32, #tpu.memory_space<vmem>>, vector<64x64xf32>
    %cst = arith.constant dense<0.000000e+00> : vector<16x64xf32>
    %2 = tpu.matmul %0, %1, %cst {dimension_numbers = #tpu.dot_dimension_numbers<[1], [0], [0], [1], [0, 0, 1, 1], [], []>} : vector<16x64xf32>, vector<64x64xf32>, vector<16x64xf32> -> vector<16x64xf32>
    %c0_3 = arith.constant 0 : index
    %c0_4 = arith.constant 0 : index
    %3 = vector.load %arg5[%c0_3, %c0_4] : memref<1x64xf32, #tpu.memory_space<vmem>>, vector<1x64xf32>
    %4 = vector.broadcast %3 : vector<1x64xf32> to vector<16x64xf32>
    %5 = arith.addf %2, %4 : vector<16x64xf32>
    %c0_5 = arith.constant 0 : index
    %c0_6 = arith.constant 0 : index
    %6 = vector.load %arg10[%c0_5, %c0_6] : memref<16x64xf32, #tpu.memory_space<vmem>>, vector<16x64xf32>
    tpu.vector_store %arg10[%c0_5, %c0_6], %5 {strides = array<i32>} : memref<16x64xf32, #tpu.memory_space<vmem>>, vector<16x64xf32>,
    %c0_7 = arith.constant 0 : index
    %c0_8 = arith.constant 0 : index
    %7 = vector.load %arg2[%c0_7, %c0_8] : memref<16x64xf32, #tpu.memory_space<vmem>>, vector<16x64xf32>
    %c0_9 = arith.constant 0 : index
    %c0_10 = arith.constant 0 : index
    %8 = vector.load %arg6[%c0_9, %c0_10] : memref<64x64xf32, #tpu.memory_space<vmem>>, vector<64x64xf32>
    %cst_11 = arith.constant dense<0.000000e+00> : vector<16x64xf32>
    %9 = tpu.matmul %7, %8, %cst_11 {dimension_numbers = #tpu.dot_dimension_numbers<[1], [0], [0], [1], [0, 0, 1, 1], [], []>} : vector<16x64xf32>, vector<64x64xf32>, vector<16x64xf32> -> vector<16x64xf32>
    %c0_12 = arith.constant 0 : index
    %c0_13 = arith.constant 0 : index
    %10 = vector.load %arg7[%c0_12, %c0_13] : memref<1x64xf32, #tpu.memory_space<vmem>>, vector<1x64xf32>
    %11 = vector.broadcast %10 : vector<1x64xf32> to vector<16x64xf32>
    %12 = arith.addf %9, %11 : vector<16x64xf32>
    %c0_14 = arith.constant 0 : index
    %c0_15 = arith.constant 0 : index
    %13 = vector.load %arg11[%c0_14, %c0_15] : memref<16x64xf32, #tpu.memory_space<vmem>>, vector<16x64xf32>
    tpu.vector_store %arg11[%c0_14, %c0_15], %12 {strides = array<i32>} : memref<16x64xf32, #tpu.memory_space<vmem>>, vector<16x64xf32>,
    %c0_16 = arith.constant 0 : index
    %c0_17 = arith.constant 0 : index
    %14 = vector.load %arg3[%c0_16, %c0_17] : memref<16x64xf32, #tpu.memory_space<vmem>>, vector<16x64xf32>
    %c0_18 = arith.constant 0 : index
    %c0_19 = arith.constant 0 : index
    %15 = vector.load %arg8[%c0_18, %c0_19] : memref<64x64xf32, #tpu.memory_space<vmem>>, vector<64x64xf32>
    %cst_20 = arith.constant dense<0.000000e+00> : vector<16x64xf32>
    %16 = tpu.matmul %14, %15, %cst_20 {dimension_numbers = #tpu.dot_dimension_numbers<[1], [0], [0], [1], [0, 0, 1, 1], [], []>} : vector<16x64xf32>, vector<64x64xf32>, vector<16x64xf32> -> vector<16x64xf32>
    %c0_21 = arith.constant 0 : index
    %c0_22 = arith.constant 0 : index
    %17 = vector.load %arg9[%c0_21, %c0_22] : memref<1x64xf32, #tpu.memory_space<vmem>>, vector<1x64xf32>
    %18 = vector.broadcast %17 : vector<1x64xf32> to vector<16x64xf32>
    %19 = arith.addf %16, %18 : vector<16x64xf32>
    %c0_23 = arith.constant 0 : index
    %c0_24 = arith.constant 0 : index
    %20 = vector.load %arg12[%c0_23, %c0_24] : memref<16x64xf32, #tpu.memory_space<vmem>>, vector<16x64xf32>
    tpu.vector_store %arg12[%c0_23, %c0_24], %19 {strides = array<i32>} : memref<16x64xf32, #tpu.memory_space<vmem>>, vector<16x64xf32>,
    return
  }
  func.func @transform_0(%arg0: i32) -> (i32, i32) {
    %c0_i32 = arith.constant 0 : i32
    %c0_i32_0 = arith.constant 0 : i32
    return %arg0, %c0_i32 : i32, i32
  }
  func.func @transform_1(%arg0: i32) -> (i32, i32) {
    %c0_i32 = arith.constant 0 : i32
    %c0_i32_0 = arith.constant 0 : i32
    return %arg0, %c0_i32 : i32, i32
  }
  func.func @transform_2(%arg0: i32) -> (i32, i32) {
    %c0_i32 = arith.constant 0 : i32
    %c0_i32_0 = arith.constant 0 : i32
    return %arg0, %c0_i32 : i32, i32
  }
  func.func @transform_3(%arg0: i32) -> (i32, i32) {
    %c0_i32 = arith.constant 0 : i32
    %c0_i32_0 = arith.constant 0 : i32
    %c0_i32_1 = arith.constant 0 : i32
    return %c0_i32, %c0_i32_0 : i32, i32
  }
  func.func @transform_4(%arg0: i32) -> (i32, i32) {
    %c0_i32 = arith.constant 0 : i32
    %c0_i32_0 = arith.constant 0 : i32
    %c0_i32_1 = arith.constant 0 : i32
    return %c0_i32, %c0_i32_0 : i32, i32
  }
  func.func @transform_5(%arg0: i32) -> (i32, i32) {
    %c0_i32 = arith.constant 0 : i32
    %c0_i32_0 = arith.constant 0 : i32
    %c0_i32_1 = arith.constant 0 : i32
    return %c0_i32, %c0_i32_0 : i32, i32
  }
  func.func @transform_6(%arg0: i32) -> (i32, i32) {
    %c0_i32 = arith.constant 0 : i32
    %c0_i32_0 = arith.constant 0 : i32
    %c0_i32_1 = arith.constant 0 : i32
    return %c0_i32, %c0_i32_0 : i32, i32
  }
  func.func @transform_7(%arg0: i32) -> (i32, i32) {
    %c0_i32 = arith.constant 0 : i32
    %c0_i32_0 = arith.constant 0 : i32
    %c0_i32_1 = arith.constant 0 : i32
    return %c0_i32, %c0_i32_0 : i32, i32
  }
  func.func @transform_8(%arg0: i32) -> (i32, i32) {
    %c0_i32 = arith.constant 0 : i32
    %c0_i32_0 = arith.constant 0 : i32
    %c0_i32_1 = arith.constant 0 : i32
    return %c0_i32, %c0_i32_0 : i32, i32
  }
  func.func @transform_9(%arg0: i32) -> (i32, i32) {
    %c0_i32 = arith.constant 0 : i32
    %c0_i32_0 = arith.constant 0 : i32
    return %arg0, %c0_i32 : i32, i32
  }
  func.func @transform_10(%arg0: i32) -> (i32, i32) {
    %c0_i32 = arith.constant 0 : i32
    %c0_i32_0 = arith.constant 0 : i32
    return %arg0, %c0_i32 : i32, i32
  }
  func.func @transform_11(%arg0: i32) -> (i32, i32) {
    %c0_i32 = arith.constant 0 : i32
    %c0_i32_0 = arith.constant 0 : i32
    return %arg0, %c0_i32 : i32, i32
  }
}

</mosaic_0001>

<llo_original>
// kernel: tpu_custom_call.1
$region0: #{tpu_custom_call.1}
  #allocation0 [shape = 'u32[]', space=smem, size = 0x4, offset = 0x4, fixed_abs, tag = 'smem constant byte address 0x4 - core index']
  #allocation1 [shape = 'u32[72,128]{1,0:T(1,128)}', space=vmem, size = 0x9000, scoped, tag = 'internal scratch']
  %s0 = inlined_call_operand.hbm [shape: f32[16,64], index: 0, kind: input, shape index: {}]
  %s1 = inlined_call_operand.hbm [shape: f32[16,64], index: 1, kind: input, shape index: {}]
  %s2 = inlined_call_operand.hbm [shape: f32[16,64], index: 2, kind: input, shape index: {}]
  %s3 = inlined_call_operand.hbm [shape: f32[64,64], index: 3, kind: input, shape index: {}]
  %s4 = inlined_call_operand.vmem [shape: f32[1,64], index: 4, kind: input, shape index: {}]
  %s5 = inlined_call_operand.hbm [shape: f32[64,64], index: 5, kind: input, shape index: {}]
  %s6 = inlined_call_operand.vmem [shape: f32[1,64], index: 6, kind: input, shape index: {}]
  %s7 = inlined_call_operand.hbm [shape: f32[64,64], index: 7, kind: input, shape index: {}]
  %s8 = inlined_call_operand.vmem [shape: f32[1,64], index: 8, kind: input, shape index: {}]
  %s9 = inlined_call_operand.hbm [shape: f32[16,64], index: 9, kind: output, shape index: {0}]
  %s10 = inlined_call_operand.hbm [shape: f32[16,64], index: 10, kind: output, shape index: {1}]
  %s11 = inlined_call_operand.hbm [shape: f32[16,64], index: 11, kind: output, shape index: {2}]
  %12 = xla_tuple %s9, %s10, %s11
  %s13 = sld [smem:[#allocation0]]
  $region86: #{tpu_custom_call.1} parent=0
    _
  %s15 = ssub.s32 1, %s13
  %s16 = scalar_select 0, %s15, %s13
  $region1: #{tpu_custom_call.1} parent=0
    #allocation2 [shape = 'u8[8192]{0}', space=vmem, size = 0x2000, scoped, tag = 'input window, operand 0, single buffered']
    #allocation3 [shape = 's32[1]{0}', space=sflag, size = 0x4, scoped, tag = 'scoped memory for tpu_custom_call.1']
    #allocation4 [shape = 's32[1]{0}', space=sflag, size = 0x4, scoped, tag = 'scoped memory for tpu_custom_call.1']
    #allocation5 [shape = 'u8[8192]{0}', space=vmem, size = 0x2000, scoped, tag = 'input window, operand 1, single buffered']
    #allocation6 [shape = 's32[1]{0}', space=sflag, size = 0x4, scoped, tag = 'scoped memory for tpu_custom_call.1']
    #allocation7 [shape = 'u8[8192]{0}', space=vmem, size = 0x2000, scoped, tag = 'input window, operand 2, single buffered']
    #allocation8 [shape = 'u8[32768]{0}', space=vmem, size = 0x8000, scoped, tag = 'input window, operand 3, single buffered']
    #allocation9 [shape = 's32[1]{0}', space=sflag, size = 0x4, scoped, tag = 'scoped memory for tpu_custom_call.1']
    #allocation10 [shape = 'u8[32768]{0}', space=vmem, size = 0x8000, scoped, tag = 'input window, operand 5, single buffered']
    #allocation11 [shape = 'u8[32768]{0}', space=vmem, size = 0x8000, scoped, tag = 'input window, operand 7, single buffered']
    #allocation12 [shape = 's32[1]{0}', space=sflag, size = 0x4, scoped, tag = 'scoped memory for tpu_custom_call.1']
    #allocation13 [shape = 'u8[8192]{0}', space=vmem, size = 0x2000, scoped, tag = 'output window, operand 0, single buffered']
    #allocation14 [shape = 'u8[8192]{0}', space=vmem, size = 0x2000, scoped, tag = 'output window, operand 1, single buffered']
    #allocation15 [shape = 's32[1]{0}', space=sflag, size = 0x4, scoped, tag = 'scoped memory for tpu_custom_call.1']
    #allocation16 [shape = 'u8[8192]{0}', space=vmem, size = 0x2000, scoped, tag = 'output window, operand 2, single buffered']
    %17 = vsyncpa [#allocation3], 0
    %18 = vsyncpa [#allocation6], 0
    %19 = vsyncpa [#allocation9], 0
    %20 = vsyncpa [#allocation12], 0
    %21 = vsyncpa [#allocation4], 0
    %22 = vsyncpa [#allocation15], 0
    // Predicated region
    $region2: #{tpu_custom_call.1} parent=1 // pred_check
      _
    $region3: #{tpu_custom_call.1} parent=1 // pred_check_branch
      %24 = sbr.rel (0) target = $region5
    $region4: #{tpu_custom_call.1} parent=1 // pred_region
      %26 = vsyncadd [#allocation3], 0
      %s27 = sshll.u32 %s0, 4
      %s28 = int_to_ptr.hbm [resolvable:$true] %s27
      %s29 = sshll.u32 [#allocation2], 4
      %s30 = int_to_ptr.vmem [resolvable:$true] %s29
      %35 = dma.hbm_to_vmem [thread:$0]  %s28, 256, %s30, [#allocation3], 128, 128, 8
    $region5: #{tpu_custom_call.1} parent=1 // pred_fallthru
      _
    // Predicated region
    $region6: #{tpu_custom_call.1} parent=1 // pred_check
      _
    $region7: #{tpu_custom_call.1} parent=1 // pred_check_branch
      %37 = sbr.rel (0) target = $region9
    $region8: #{tpu_custom_call.1} parent=1 // pred_region
      %39 = vsyncadd [#allocation6], 0
      %s40 = sshll.u32 %s1, 4
      %s41 = int_to_ptr.hbm [resolvable:$true] %s40
      %s42 = sshll.u32 [#allocation5], 4
      %s43 = int_to_ptr.vmem [resolvable:$true] %s42
      %48 = dma.hbm_to_vmem [thread:$0]  %s41, 256, %s43, [#allocation6], 128, 128, 8
    $region9: #{tpu_custom_call.1} parent=1 // pred_fallthru
      _
    // Predicated region
    $region10: #{tpu_custom_call.1} parent=1 // pred_check
      _
    $region11: #{tpu_custom_call.1} parent=1 // pred_check_branch
      %50 = sbr.rel (0) target = $region13
    $region12: #{tpu_custom_call.1} parent=1 // pred_region
      %52 = vsyncadd [#allocation6], 0
      %s53 = sshll.u32 %s2, 4
      %s54 = int_to_ptr.hbm [resolvable:$true] %s53
      %s55 = sshll.u32 [#allocation7], 4
      %s56 = int_to_ptr.vmem [resolvable:$true] %s55
      %61 = dma.hbm_to_vmem [thread:$0]  %s54, 256, %s56, [#allocation6], 128, 128, 8
    $region13: #{tpu_custom_call.1} parent=1 // pred_fallthru
      _
    // Predicated region
    $region14: #{tpu_custom_call.1} parent=1 // pred_check
      _
    $region15: #{tpu_custom_call.1} parent=1 // pred_check_branch
      %63 = sbr.rel (0) target = $region17
    $region16: #{tpu_custom_call.1} parent=1 // pred_region
      %65 = vsyncadd [#allocation9], 0
      %s66 = sshll.u32 %s3, 4
      %s67 = int_to_ptr.hbm [resolvable:$true] %s66
      %s68 = sshll.u32 [#allocation8], 4
      %s69 = int_to_ptr.vmem [resolvable:$true] %s68
      %74 = dma.hbm_to_vmem [thread:$0]  %s67, 1024, %s69, [#allocation9], 128, 128, 8
    $region17: #{tpu_custom_call.1} parent=1 // pred_fallthru
      _
    // Predicated region
    $region18: #{tpu_custom_call.1} parent=1 // pred_check
      _
    $region19: #{tpu_custom_call.1} parent=1 // pred_check_branch
      %76 = sbr.rel (0) target = $region21
    $region20: #{tpu_custom_call.1} parent=1 // pred_region
      _
    $region21: #{tpu_custom_call.1} parent=1 // pred_fallthru
      _
    // Predicated region
    $region22: #{tpu_custom_call.1} parent=1 // pred_check
      _
    $region23: #{tpu_custom_call.1} parent=1 // pred_check_branch
      %78 = sbr.rel (0) target = $region25
    $region24: #{tpu_custom_call.1} parent=1 // pred_region
      %80 = vsyncadd [#allocation9], 0
      %s81 = sshll.u32 %s5, 4
      %s82 = int_to_ptr.hbm [resolvable:$true] %s81
      %s83 = sshll.u32 [#allocation10], 4
      %s84 = int_to_ptr.vmem [resolvable:$true] %s83
      %89 = dma.hbm_to_vmem [thread:$0]  %s82, 1024, %s84, [#allocation9], 128, 128, 8
    $region25: #{tpu_custom_call.1} parent=1 // pred_fallthru
      _
    // Predicated region
    $region26: #{tpu_custom_call.1} parent=1 // pred_check
      _
    $region27: #{tpu_custom_call.1} parent=1 // pred_check_branch
      %91 = sbr.rel (0) target = $region29
    $region28: #{tpu_custom_call.1} parent=1 // pred_region
      _
    $region29: #{tpu_custom_call.1} parent=1 // pred_fallthru
      _
    // Predicated region
    $region30: #{tpu_custom_call.1} parent=1 // pred_check
      _
    $region31: #{tpu_custom_call.1} parent=1 // pred_check_branch
      %93 = sbr.rel (0) target = $region33
    $region32: #{tpu_custom_call.1} parent=1 // pred_region
      %95 = vsyncadd [#allocation12], 0
      %s96 = sshll.u32 %s7, 4
      %s97 = int_to_ptr.hbm [resolvable:$true] %s96
      %s98 = sshll.u32 [#allocation11], 4
      %s99 = int_to_ptr.vmem [resolvable:$true] %s98
      %104 = dma.hbm_to_vmem [thread:$0]  %s97, 1024, %s99, [#allocation12], 128, 128, 8
    $region33: #{tpu_custom_call.1} parent=1 // pred_fallthru
      _
    // Predicated region
    $region34: #{tpu_custom_call.1} parent=1 // pred_check
      _
    $region35: #{tpu_custom_call.1} parent=1 // pred_check_branch
      %106 = sbr.rel (0) target = $region37
    $region36: #{tpu_custom_call.1} parent=1 // pred_region
      _
    $region37: #{tpu_custom_call.1} parent=1 // pred_fallthru
      _
    // Predicated region
    $region38: #{tpu_custom_call.1} parent=1 // pred_check
      _
    $region39: #{tpu_custom_call.1} parent=1 // pred_check_branch
      %108 = sbr.rel (0) target = $region41
    $region40: #{tpu_custom_call.1} parent=1 // pred_region
      %110 = dma.done [#allocation3], 256
    $region41: #{tpu_custom_call.1} parent=1 // pred_fallthru
      _
    // Predicated region
    $region42: #{tpu_custom_call.1} parent=1 // pred_check
      _
    $region43: #{tpu_custom_call.1} parent=1 // pred_check_branch
      %112 = sbr.rel (0) target = $region45
    $region44: #{tpu_custom_call.1} parent=1 // pred_region
      %114 = dma.done [#allocation6], 256
    $region45: #{tpu_custom_call.1} parent=1 // pred_fallthru
      _
    // Predicated region
    $region46: #{tpu_custom_call.1} parent=1 // pred_check
      _
    $region47: #{tpu_custom_call.1} parent=1 // pred_check_branch
      %116 = sbr.rel (0) target = $region49
    $region48: #{tpu_custom_call.1} parent=1 // pred_region
      %118 = dma.done [#allocation6], 256
    $region49: #{tpu_custom_call.1} parent=1 // pred_fallthru
      _
    // Predicated region
    $region50: #{tpu_custom_call.1} parent=1 // pred_check
      _
    $region51: #{tpu_custom_call.1} parent=1 // pred_check_branch
      %120 = sbr.rel (0) target = $region53
    $region52: #{tpu_custom_call.1} parent=1 // pred_region
      %122 = dma.done [#allocation9], 1024
    $region53: #{tpu_custom_call.1} parent=1 // pred_fallthru
      _
    // Predicated region
    $region54: #{tpu_custom_call.1} parent=1 // pred_check
      _
    $region55: #{tpu_custom_call.1} parent=1 // pred_check_branch
      %124 = sbr.rel (0) target = $region57
    $region56: #{tpu_custom_call.1} parent=1 // pred_region
      %126 = dma.done [#allocation9], 1024
    $region57: #{tpu_custom_call.1} parent=1 // pred_fallthru
      _
    // Predicated region
    $region58: #{tpu_custom_call.1} parent=1 // pred_check
      _
    $region59: #{tpu_custom_call.1} parent=1 // pred_check_branch
      %128 = sbr.rel (0) target = $region61
    $region60: #{tpu_custom_call.1} parent=1 // pred_region
      %130 = dma.done [#allocation12], 1024
    $region61: #{tpu_custom_call.1} parent=1 // pred_fallthru
      _
    %v131 = vld [vmem:[#allocation2] sm:$0xff]
    %v132 = vld [vmem:[#allocation2 + $0x8] sm:$0xff]
    %v133 = vld [vmem:[#allocation8] sm:$0xff]
    %v134 = vld [vmem:[#allocation8 + $0x8] sm:$0xff]
    %v135 = vld [vmem:[#allocation8 + $0x10] sm:$0xff]
    %v136 = vld [vmem:[#allocation8 + $0x18] sm:$0xff]
    %v137 = vld [vmem:[#allocation8 + $0x20] sm:$0xff]
    %v138 = vld [vmem:[#allocation8 + $0x28] sm:$0xff]
    %v139 = vld [vmem:[#allocation8 + $0x30] sm:$0xff]
    %v140 = vld [vmem:[#allocation8 + $0x38] sm:$0xff]
    %v141 = vld [vmem:[%s4] sm:$0x1]
    %v143 = vperm.slane %v141, 0
    %vm145 = vcmask 523264
    %v147 = vsel %vm145, %v131, 0
    %v150 = vsel %vm145, %v132, 0
    %152 = vmatpush.msra.mxu0 0.0
    %153 = vmatpush.msra.mxu0 0.0
    %154 = vmatpush.msra.mxu0 0.0
    %155 = vmatpush.msra.mxu0 0.0
    %156 = vmatpush.msra.mxu0 0.0
    %157 = vmatpush.msra.mxu0 0.0
    %158 = vmatpush.msra.mxu0 0.0
    %159 = vmatpush.msra.mxu0 0.0
    %160 = vmatpush.msra.mxu0 %v140
    %161 = vmatpush.msra.mxu0 %v139
    %162 = vmatpush.msra.mxu0 %v138
    %163 = vmatpush.msra.mxu0 %v137
    %164 = vmatpush.msra.mxu0 %v136
    %165 = vmatpush.msra.mxu0 %v135
    %166 = vmatpush.msra.mxu0 %v134
    %167 = vmatpush.msra.mxu0 %v133
    %168 = vmatmul.f32.gmra.mxu0 %v147
    %v169 = vpop.f32.mrf.mxu0
    %v170 = vadd.f32 %v143, %v169
    %171 = vmatmul.f32.gmra.mxu0 %v150
    %v172 = vpop.f32.mrf.mxu0
    %v173 = vadd.f32 %v143, %v172
    %174 = vdwg.mxu0
    %175 = vst.msk [vmem:[#allocation13] sm:$0xff] %vm145, %v170
    %176 = vst.msk [vmem:[#allocation13 + $0x8] sm:$0xff] %vm145, %v173
    %v177 = vld [vmem:[#allocation5] sm:$0xff]
    %v178 = vld [vmem:[#allocation5 + $0x8] sm:$0xff]
    %v179 = vld [vmem:[#allocation10] sm:$0xff]
    %v180 = vld [vmem:[#allocation10 + $0x8] sm:$0xff]
    %v181 = vld [vmem:[#allocation10 + $0x10] sm:$0xff]
    %v182 = vld [vmem:[#allocation10 + $0x18] sm:$0xff]
    %v183 = vld [vmem:[#allocation10 + $0x20] sm:$0xff]
    %v184 = vld [vmem:[#allocation10 + $0x28] sm:$0xff]
    %v185 = vld [vmem:[#allocation10 + $0x30] sm:$0xff]
    %v186 = vld [vmem:[#allocation10 + $0x38] sm:$0xff]
    %v187 = vld [vmem:[%s6] sm:$0x1]
    %v189 = vperm.slane %v187, 0
    %v192 = vsel %vm145, %v177, 0
    %v195 = vsel %vm145, %v178, 0
    %197 = vmatpush.msra.mxu0 0.0
    %198 = vmatpush.msra.mxu0 0.0
    %199 = vmatpush.msra.mxu0 0.0
    %200 = vmatpush.msra.mxu0 0.0
    %201 = vmatpush.msra.mxu0 0.0
    %202 = vmatpush.msra.mxu0 0.0
    %203 = vmatpush.msra.mxu0 0.0
    %204 = vmatpush.msra.mxu0 0.0
    %205 = vmatpush.msra.mxu0 %v186
    %206 = vmatpush.msra.mxu0 %v185
    %207 = vmatpush.msra.mxu0 %v184
    %208 = vmatpush.msra.mxu0 %v183
    %209 = vmatpush.msra.mxu0 %v182
    %210 = vmatpush.msra.mxu0 %v181
    %211 = vmatpush.msra.mxu0 %v180
    %212 = vmatpush.msra.mxu0 %v179
    %213 = vmatmul.f32.gmra.mxu0 %v192
    %v214 = vpop.f32.mrf.mxu0
    %v215 = vadd.f32 %v189, %v214
    %216 = vmatmul.f32.gmra.mxu0 %v195
    %v217 = vpop.f32.mrf.mxu0
    %v218 = vadd.f32 %v189, %v217
    %219 = vdwg.mxu0
    %220 = vst.msk [vmem:[#allocation14] sm:$0xff] %vm145, %v215
    %221 = vst.msk [vmem:[#allocation14 + $0x8] sm:$0xff] %vm145, %v218
    %v222 = vld [vmem:[#allocation7] sm:$0xff]
    %v223 = vld [vmem:[#allocation7 + $0x8] sm:$0xff]
    %v224 = vld [vmem:[#allocation11] sm:$0xff]
    %v225 = vld [vmem:[#allocation11 + $0x8] sm:$0xff]
    %v226 = vld [vmem:[#allocation11 + $0x10] sm:$0xff]
    %v227 = vld [vmem:[#allocation11 + $0x18] sm:$0xff]
    %v228 = vld [vmem:[#allocation11 + $0x20] sm:$0xff]
    %v229 = vld [vmem:[#allocation11 + $0x28] sm:$0xff]
    %v230 = vld [vmem:[#allocation11 + $0x30] sm:$0xff]
    %v231 = vld [vmem:[#allocation11 + $0x38] sm:$0xff]
    %v232 = vld [vmem:[%s8] sm:$0x1]
    %v234 = vperm.slane %v232, 0
    %v237 = vsel %vm145, %v222, 0
    %v240 = vsel %vm145, %v223, 0
    %242 = vmatpush.msra.mxu0 0.0
    %243 = vmatpush.msra.mxu0 0.0
    %244 = vmatpush.msra.mxu0 0.0
    %245 = vmatpush.msra.mxu0 0.0
    %246 = vmatpush.msra.mxu0 0.0
    %247 = vmatpush.msra.mxu0 0.0
    %248 = vmatpush.msra.mxu0 0.0
    %249 = vmatpush.msra.mxu0 0.0
    %250 = vmatpush.msra.mxu0 %v231
    %251 = vmatpush.msra.mxu0 %v230
    %252 = vmatpush.msra.mxu0 %v229
    %253 = vmatpush.msra.mxu0 %v228
    %254 = vmatpush.msra.mxu0 %v227
    %255 = vmatpush.msra.mxu0 %v226
    %256 = vmatpush.msra.mxu0 %v225
    %257 = vmatpush.msra.mxu0 %v224
    %258 = vmatmul.f32.gmra.mxu0 %v237
    %v259 = vpop.f32.mrf.mxu0
    %v260 = vadd.f32 %v234, %v259
    %261 = vmatmul.f32.gmra.mxu0 %v240
    %v262 = vpop.f32.mrf.mxu0
    %v263 = vadd.f32 %v234, %v262
    %264 = vdwg.mxu0
    %265 = vst.msk [vmem:[#allocation16] sm:$0xff] %vm145, %v260
    %266 = vst.msk [vmem:[#allocation16 + $0x8] sm:$0xff] %vm145, %v263
    // Predicated region
    $region62: #{tpu_custom_call.1} parent=1 // pred_check
      _
    $region63: #{tpu_custom_call.1} parent=1 // pred_check_branch
      %268 = sbr.rel (0) target = $region65
    $region64: #{tpu_custom_call.1} parent=1 // pred_region
      %270 = vsyncadd [#allocation4], 0
      %s271 = sshll.u32 [#allocation13], 4
      %s272 = int_to_ptr.vmem [resolvable:$true] %s271
      %s273 = sshll.u32 %s9, 4
      %s274 = int_to_ptr.hbm [resolvable:$true] %s273
      %279 = dma.vmem_to_hbm [thread:$0]  %s272, 256, %s274, [#allocation4], 128, 128, 8
    $region65: #{tpu_custom_call.1} parent=1 // pred_fallthru
      _
    // Predicated region
    $region66: #{tpu_custom_call.1} parent=1 // pred_check
      _
    $region67: #{tpu_custom_call.1} parent=1 // pred_check_branch
      %281 = sbr.rel (0) target = $region69
    $region68: #{tpu_custom_call.1} parent=1 // pred_region
      %283 = vsyncadd [#allocation15], 0
      %s284 = sshll.u32 [#allocation14], 4
      %s285 = int_to_ptr.vmem [resolvable:$true] %s284
      %s286 = sshll.u32 %s10, 4
      %s287 = int_to_ptr.hbm [resolvable:$true] %s286
      %292 = dma.vmem_to_hbm [thread:$0]  %s285, 256, %s287, [#allocation15], 128, 128, 8
    $region69: #{tpu_custom_call.1} parent=1 // pred_fallthru
      _
    // Predicated region
    $region70: #{tpu_custom_call.1} parent=1 // pred_check
      _
    $region71: #{tpu_custom_call.1} parent=1 // pred_check_branch
      %294 = sbr.rel (0) target = $region73
    $region72: #{tpu_custom_call.1} parent=1 // pred_region
      %296 = vsyncadd [#allocation15], 0
      %s297 = sshll.u32 [#allocation16], 4
      %s298 = int_to_ptr.vmem [resolvable:$true] %s297
      %s299 = sshll.u32 %s11, 4
      %s300 = int_to_ptr.hbm [resolvable:$true] %s299
      %305 = dma.vmem_to_hbm [thread:$0]  %s298, 256, %s300, [#allocation15], 128, 128, 8
    $region73: #{tpu_custom_call.1} parent=1 // pred_fallthru
      _
    // Predicated region
    $region74: #{tpu_custom_call.1} parent=1 // pred_check
      _
    $region75: #{tpu_custom_call.1} parent=1 // pred_check_branch
      %307 = sbr.rel (0) target = $region77
    $region76: #{tpu_custom_call.1} parent=1 // pred_region
      %309 = dma.done [#allocation4], 256
    $region77: #{tpu_custom_call.1} parent=1 // pred_fallthru
      _
    // Predicated region
    $region78: #{tpu_custom_call.1} parent=1 // pred_check
      _
    $region79: #{tpu_custom_call.1} parent=1 // pred_check_branch
      %311 = sbr.rel (0) target = $region81
    $region80: #{tpu_custom_call.1} parent=1 // pred_region
      %313 = dma.done [#allocation15], 256
    $region81: #{tpu_custom_call.1} parent=1 // pred_fallthru
      _
    // Predicated region
    $region82: #{tpu_custom_call.1} parent=1 // pred_check
      _
    $region83: #{tpu_custom_call.1} parent=1 // pred_check_branch
      %315 = sbr.rel (0) target = $region85
    $region84: #{tpu_custom_call.1} parent=1 // pred_region
      %317 = dma.done [#allocation15], 256
    $region85: #{tpu_custom_call.1} parent=1 // pred_fallthru
      _
    %318 = vsyncpa [#allocation3], 1
    %319 = vsyncpa [#allocation6], 1
    %320 = vsyncpa [#allocation9], 1
    %321 = vsyncpa [#allocation12], 1
    %322 = vsyncpa [#allocation4], 1
    %323 = vsyncpa [#allocation15], 1

</llo_original>
